<compile_context>
chip_gen: v5e
topology: v5e:2x2
jax: 0.10.0
libtpu: 0.0.40
codegen_flags: <defaults>
</compile_context>

<pallas_src>
import functools
import math

import jax
import jax.numpy as jnp
from jax import lax
from jax.experimental import pallas as pl
from jax.experimental.pallas import tpu as pltpu

_PDIST_EPS = 1e-6     # torch.nn.PairwiseDistance default eps (added elementwise to diff)
_NEG_BIG = -3.0e38    # "minus infinity" for masked argmax candidates


def _round_up(a, b):
    return (a + b - 1) // b * b


def _lcm(a, b):
    return a * b // math.gcd(a, b)


def _der_kernel(q_ref, kv_ref, c_ref, r_ref, out_ref, m_sc, s_sc, *,
                n_real, d_real, tm, tk, eps_log, padded):
    i = pl.program_id(0)
    k = pl.program_id(1)
    nk = pl.num_programs(1)
    eps_pd = jnp.float32(_PDIST_EPS)

    @pl.when(k == 0)
    def _init():
        m_sc[...] = jnp.full(m_sc.shape, _NEG_BIG, jnp.float32)
        s_sc[...] = jnp.zeros(s_sc.shape, jnp.float32)

    q = q_ref[...]                                   # (tm, Dp) matmul dtype
    kv = kv_ref[...]                                 # (tk, Dp) matmul dtype

    # Raw dot products on the MXU with f32 accumulation.
    dots_raw = lax.dot_general(q, kv, (((1,), (1,)), ((), ())),
                               preferred_element_type=jnp.float32)   # (tm, tk)

    # One lane iota + one sublane iota; no full-tile global-index matrices.
    col_l = lax.broadcasted_iota(jnp.int32, (tm, tk), 1)             # (tm, tk)
    row_l = lax.broadcasted_iota(jnp.int32, (tm, 1), 0)              # (tm, 1)

    # torch: dots[i, i] = -1.  diag column (local) = global_row - k*tk; falls
    # outside [0, tk) for tiles that do not touch the diagonal -> mask is no-op.
    diag_col = row_l + (i * tm - k * tk)
    dots_cmp = jnp.where(col_l == diag_col, jnp.float32(-1.0), dots_raw)
    if padded:
        # Padded columns must never win the argmax (all-false for non-last tiles).
        dots_cmp = jnp.where(col_l >= (n_real - k * tk),
                             jnp.float32(_NEG_BIG), dots_cmp)

    # Within-tile max with first-occurrence tie-breaking (matches torch.max).
    tile_max = jnp.max(dots_cmp, axis=1, keepdims=True)              # (tm, 1)
    is_max = dots_cmp == tile_max
    first_l = jnp.min(jnp.where(is_max, col_l, tk), axis=1, keepdims=True)
    onehot = col_l == first_l                                        # (tm, tk) bool

    # Fused gather of s = c_j - 2*<x_i, x_j> at the selected column.  Uses the
    # RAW dot so a selected diagonal reproduces rho = sqrt(D)*eps exactly.
    val = c_ref[...] - 2.0 * dots_raw                                # (1,tk)->(tm,tk)
    s_at = jnp.sum(jnp.where(onehot, val, 0.0), axis=1, keepdims=True)

    # Online merge across column tiles.  Strict ">" keeps the first occurrence
    # because k sweeps columns in increasing order.
    better = tile_max > m_sc[...]
    m_sc[...] = jnp.where(better, tile_max, m_sc[...])
    s_sc[...] = jnp.where(better, s_at, s_sc[...])

    @pl.when(k == nk - 1)
    def _finalize():
        rho2 = (r_ref[...] + s_sc[...]
                + jnp.float32(d_real) * eps_pd * eps_pd)             # (tm, 1)
        rho = jnp.sqrt(jnp.maximum(rho2, 0.0))                       # clamp vs. cancellation
        logv = jnp.log(rho + jnp.float32(eps_log))
        if padded:
            row_g = i * tm + row_l
            logv = jnp.where(row_g < n_real, logv, 0.0)              # drop padded rows
        out_ref[...] = jnp.full(out_ref.shape, jnp.sum(logv), dtype=jnp.float32)


def differential_entropy_regularization(x, eps=1e-8, *, block_rows=None,
                                         block_cols=None, dots_in_bf16=False,
                                         kv_buffers=None):
    """x: (N, D) float array.  Returns the scalar float32 loss."""
    n, d = x.shape
    dp = _round_up(d, 128)                          # lane-dense feature axis (zero pad: exact)
    tm = block_rows if block_rows is not None else min(256, _round_up(n, 8))
    tk = block_cols if block_cols is not None else min(256, _round_up(n, 8))
    assert tm % 8 == 0 and tk % 8 == 0, "tile sizes must be multiples of 8 sublanes"
    npad = _round_up(n, _lcm(tm, tk))

    # v7x has 2 TensorCores; make sure the "parallel" row axis has >= 2 tiles
    # when that is free to do so (small-N regime, traffic negligible elsewhere).
    if block_rows is None and npad // tm < 2 and npad >= 16 and (npad // 2) % 8 == 0:
        tm = npad // 2
    grid_rows, grid_k = npad // tm, npad // tk

    # Lane-oriented neighbour-statistic input must tile cleanly.
    if not (tk % 128 == 0 or tk == npad):
        raise ValueError("block_cols must be a multiple of 128 or cover the whole "
                         "padded point count (got tk=%d, npad=%d)" % (tk, npad))

    xp = jnp.pad(x, ((0, npad - n), (0, dp - d)))
    xf = xp.astype(jnp.float32)
    sq = jnp.sum(xf * xf, axis=1)
    sm = jnp.sum(xf, axis=1)
    c_stat = (sq - 2.0 * _PDIST_EPS * sm).reshape(1, npad)   # neighbour stat (lane-dense)
    r_stat = (sq + 2.0 * _PDIST_EPS * sm).reshape(npad, 1)   # row stat
    x_mm = xp.astype(jnp.bfloat16) if (dots_in_bf16 and xp.dtype == jnp.float32) else xp
    itemsize = jnp.dtype(x_mm.dtype).itemsize

    kernel = functools.partial(_der_kernel, n_real=n, d_real=d, tm=tm, tk=tk,
                               eps_log=float(eps), padded=(npad > n))

    kv_spec_kwargs = {}
    if kv_buffers is not None and kv_buffers != 2:
        kv_spec_kwargs["pipeline_mode"] = pl.Buffered(kv_buffers)

    # VMEM limit from the actual footprint (double-buffered blocks + generous
    # full-tile temporary budget) instead of a flat 48 MiB (v7x has 64 MiB).
    vmem_need = (2 * (tm + tk) * dp * itemsize      # q / kv blocks, double-buffered
                 + 2 * (tm + tk + tm) * 4           # r / c / out blocks
                 + 12 * tm * tk * 4                 # (tm, tk) f32/int temporaries
                 + 2 * tm * 4                       # scratch
                 + (2 << 20))                       # compiler-internal margin
    vmem_limit = int(min(max(vmem_need, 16 << 20), 100 << 20))

    out = pl.pallas_call(
        kernel,
        out_shape=jax.ShapeDtypeStruct((grid_rows, 1, tm), jnp.float32),
        grid_spec=pltpu.PrefetchScalarGridSpec(
            num_scalar_prefetch=0,
            grid=(grid_rows, grid_k),                                 # reduction axis last
            in_specs=[
                pl.BlockSpec((tm, dp), lambda i, k: (i, 0)),          # row tile (resident over k)
                pl.BlockSpec((tk, dp), lambda i, k: (k, 0),           # neighbour tile (streamed)
                             **kv_spec_kwargs),
                pl.BlockSpec((1, tk), lambda i, k: (0, k)),           # c_j (lane-oriented)
                pl.BlockSpec((tm, 1), lambda i, k: (i, 0)),           # r_i (resident over k)
            ],
            out_specs=pl.BlockSpec((1, 1, tm), lambda i, k: (i, 0, 0)),
            scratch_shapes=[pltpu.VMEM((tm, 1), jnp.float32)] * 2,    # running max / stat
        ),
        compiler_params=pltpu.CompilerParams(
            dimension_semantics=("parallel", "arbitrary"),            # rows shard across TCs
            vmem_limit_bytes=vmem_limit,
        ),
        cost_estimate=pl.CostEstimate(
            flops=2 * npad * npad * dp,
            transcendentals=2 * npad,
            bytes_accessed=((grid_rows + 1) * npad * dp * itemsize
                            + grid_rows * npad * 4 + npad * 4 + grid_rows * tm * 4),
        ),
    )(x_mm, x_mm, c_stat, r_stat)
    return -jnp.sum(out[:, 0, 0]) / jnp.float32(n)


def _reference_loss(x, eps=1e-8):
    """Pure-JAX reference with the exact PyTorch-module math."""
    n = x.shape[0]
    dots = jnp.dot(x, x.T, precision=jax.lax.Precision.HIGHEST)
    dots = dots.at[jnp.diag_indices(n)].set(-1.0)
    idx = jnp.argmax(dots, axis=1)
    diff = x - x[idx] + _PDIST_EPS
    rho = jnp.sqrt(jnp.sum(diff * diff, axis=1))
    return -jnp.mean(jnp.log(rho + eps))


if __name__ == "__main__":
    root = jax.random.PRNGKey(0)
    k1, k2, k3 = jax.random.split(root, 3)

    # Test 1: small single-tile case (N=8 points, D=32 features; D padded 32->128).
    x1 = jax.random.normal(k1, (8, 32), dtype=jnp.float32)
    loss1 = differential_entropy_regularization(x1)
    jax.block_until_ready(loss1)
    ref1 = _reference_loss(x1)
    assert jnp.allclose(loss1, ref1, rtol=2e-2, atol=1e-2), (loss1, ref1)

    # Test 2: explicit small tiles so the multi-tile online-argmax path is exercised
    # (4x2 grid, diagonal-crossing tiles, padded rows/columns: 200 -> 256).
    x2 = jax.random.normal(k2, (200, 48), dtype=jnp.float32)
    loss2 = differential_entropy_regularization(x2, block_rows=64, block_cols=128)
    jax.block_until_ready(loss2)
    ref2 = _reference_loss(x2)
    assert jnp.allclose(loss2, ref2, rtol=2e-2, atol=1e-2), (loss2, ref2)

    # Test 3: default tiling path (tm=tk=256, 2x2 grid, padding 300 -> 512).
    x3 = jax.random.normal(k3, (300, 40), dtype=jnp.float32)
    loss3 = differential_entropy_regularization(x3)
    jax.block_until_ready(loss3)
    ref3 = _reference_loss(x3)
    assert jnp.allclose(loss3, ref3, rtol=2e-2, atol=1e-2), (loss3, ref3)

    print("KERNEL_OK")
</pallas_src>

<mosaic_0001>
module attributes {stable_mosaic.version = 11 : i64} {
  func.func @_der_kernel(%arg0: i32, %arg1: i32, %arg2: memref<8x128xf32, #tpu.memory_space<vmem>>, %arg3: memref<8x128xf32, #tpu.memory_space<vmem>>, %arg4: memref<1x8xf32, #tpu.memory_space<vmem>>, %arg5: memref<8x1xf32, #tpu.memory_space<vmem>>, %arg6: memref<1x1x8xf32, #tpu.memory_space<vmem>>, %arg7: memref<8x1xf32, #tpu.memory_space<vmem>>, %arg8: memref<8x1xf32, #tpu.memory_space<vmem>>) attributes {dimension_semantics = [#tpu.dimension_semantics<parallel>, #tpu.dimension_semantics<arbitrary>], iteration_bounds = array<i64: 1, 1>, scalar_prefetch = 0 : i64, scratch_operands = 2 : i64, tpu.core_type = #tpu.core_type<tc>, window_params = [{transform_indices = @transform_0, window_bounds = array<i64: 8, 128>}, {transform_indices = @transform_1, window_bounds = array<i64: 8, 128>}, {transform_indices = @transform_2, window_bounds = array<i64: 1, 8>}, {transform_indices = @transform_3, window_bounds = array<i64: 8, 1>}, {transform_indices = @transform_4, window_bounds = array<i64: 1, 1, 8>}]} {
    %c0_i32 = arith.constant 0 : i32
    %0 = arith.cmpi eq, %arg1, %c0_i32 : i32
    %1 = arith.extui %0 : i1 to i32
    %c0_i32_0 = arith.constant 0 : i32
    %2 = arith.cmpi ne, %1, %c0_i32_0 : i32
    scf.if %2 {
      %cst_27 = arith.constant -3.000000e+38 : f32
      %47 = vector.broadcast %cst_27 : f32 to vector<8x1xf32>
      %c0_28 = arith.constant 0 : index
      %c0_29 = arith.constant 0 : index
      %48 = vector.load %arg7[%c0_28, %c0_29] : memref<8x1xf32, #tpu.memory_space<vmem>>, vector<8x1xf32>
      tpu.vector_store %arg7[%c0_28, %c0_29], %47 {strides = array<i32>} : memref<8x1xf32, #tpu.memory_space<vmem>>, vector<8x1xf32>,
      %cst_30 = arith.constant 0.000000e+00 : f32
      %49 = vector.broadcast %cst_30 : f32 to vector<8x1xf32>
      %c0_31 = arith.constant 0 : index
      %c0_32 = arith.constant 0 : index
      %50 = vector.load %arg8[%c0_31, %c0_32] : memref<8x1xf32, #tpu.memory_space<vmem>>, vector<8x1xf32>
      tpu.vector_store %arg8[%c0_31, %c0_32], %49 {strides = array<i32>} : memref<8x1xf32, #tpu.memory_space<vmem>>, vector<8x1xf32>,
    } else {
    }
    %c0 = arith.constant 0 : index
    %c0_1 = arith.constant 0 : index
    %3 = vector.load %arg2[%c0, %c0_1] : memref<8x128xf32, #tpu.memory_space<vmem>>, vector<8x128xf32>
    %c0_2 = arith.constant 0 : index
    %c0_3 = arith.constant 0 : index
    %4 = vector.load %arg3[%c0_2, %c0_3] : memref<8x128xf32, #tpu.memory_space<vmem>>, vector<8x128xf32>
    %cst = arith.constant dense<0.000000e+00> : vector<8x8xf32>
    %5 = tpu.matmul %3, %4, %cst {dimension_numbers = #tpu.dot_dimension_numbers<[1], [1], [0], [0], [0, 0, 1, 0], [], []>} : vector<8x128xf32>, vector<8x128xf32>, vector<8x8xf32> -> vector<8x8xf32>
    %6 = tpu.iota {dimensions = array<i32: 1>} : vector<8x8xi32>
    %7 = tpu.iota {dimensions = array<i32: 0>} : vector<8x1xi32>
    %c8_i32 = arith.constant 8 : i32
    %8 = arith.muli %arg0, %c8_i32 : i32
    %c8_i32_4 = arith.constant 8 : i32
    %9 = arith.muli %arg1, %c8_i32_4 : i32
    %10 = arith.subi %8, %9 : i32
    %11 = vector.broadcast %10 : i32 to vector<8x1xi32>
    %12 = arith.addi %7, %11 : vector<8x1xi32>
    %13 = vector.broadcast %12 : vector<8x1xi32> to vector<8x8xi32>
    %14 = arith.cmpi eq, %6, %13 : vector<8x8xi32>
    %cst_5 = arith.constant -1.000000e+00 : f32
    %15 = vector.broadcast %cst_5 : f32 to vector<8x8xf32>
    %16 = arith.select %14, %15, %5 : vector<8x8xi1>, vector<8x8xf32>
    %cst_6 = arith.constant dense<0xFF800000> : vector<8xf32>
    %17 = vector.multi_reduction <maximumf>, %16, %cst_6 [1] : vector<8x8xf32> to vector<8xf32>
    %18 = vector.shape_cast %17 : vector<8xf32> to vector<8x1xf32>
    %19 = vector.broadcast %18 : vector<8x1xf32> to vector<8x8xf32>
    %20 = arith.cmpf oeq, %16, %19 : vector<8x8xf32>
    %c8_i32_7 = arith.constant 8 : i32
    %21 = vector.broadcast %c8_i32_7 : i32 to vector<8x8xi32>
    %22 = arith.select %20, %6, %21 : vector<8x8xi1>, vector<8x8xi32>
    %cst_8 = arith.constant dense<2147483647> : vector<8xi32>
    %23 = vector.multi_reduction <minsi>, %22, %cst_8 [1] : vector<8x8xi32> to vector<8xi32>
    %24 = vector.shape_cast %23 : vector<8xi32> to vector<8x1xi32>
    %25 = vector.broadcast %24 : vector<8x1xi32> to vector<8x8xi32>
    %26 = arith.cmpi eq, %6, %25 : vector<8x8xi32>
    %c0_9 = arith.constant 0 : index
    %c0_10 = arith.constant 0 : index
    %27 = vector.load %arg4[%c0_9, %c0_10] : memref<1x8xf32, #tpu.memory_space<vmem>>, vector<1x8xf32>
    %cst_11 = arith.constant 2.000000e+00 : f32
    %28 = vector.broadcast %cst_11 : f32 to vector<8x8xf32>
    %29 = arith.mulf %28, %5 : vector<8x8xf32>
    %30 = vector.broadcast %27 : vector<1x8xf32> to vector<8x8xf32>
    %31 = arith.subf %30, %29 : vector<8x8xf32>
    %cst_12 = arith.constant 0.000000e+00 : f32
    %32 = vector.broadcast %cst_12 : f32 to vector<8x8xf32>
    %33 = arith.select %26, %31, %32 : vector<8x8xi1>, vector<8x8xf32>
    %cst_13 = arith.constant dense<0.000000e+00> : vector<8xf32>
    %34 = vector.multi_reduction <add>, %33, %cst_13 [1] : vector<8x8xf32> to vector<8xf32>
    %35 = vector.shape_cast %34 : vector<8xf32> to vector<8x1xf32>
    %c0_14 = arith.constant 0 : index
    %c0_15 = arith.constant 0 : index
    %36 = vector.load %arg7[%c0_14, %c0_15] : memref<8x1xf32, #tpu.memory_space<vmem>>, vector<8x1xf32>
    %37 = arith.cmpf ogt, %18, %36 : vector<8x1xf32>
    %c0_16 = arith.constant 0 : index
    %c0_17 = arith.constant 0 : index
    %38 = vector.load %arg7[%c0_16, %c0_17] : memref<8x1xf32, #tpu.memory_space<vmem>>, vector<8x1xf32>
    %39 = arith.select %37, %18, %38 : vector<8x1xi1>, vector<8x1xf32>
    %c0_18 = arith.constant 0 : index
    %c0_19 = arith.constant 0 : index
    %40 = vector.load %arg7[%c0_18, %c0_19] : memref<8x1xf32, #tpu.memory_space<vmem>>, vector<8x1xf32>
    tpu.vector_store %arg7[%c0_18, %c0_19], %39 {strides = array<i32>} : memref<8x1xf32, #tpu.memory_space<vmem>>, vector<8x1xf32>,
    %c0_20 = arith.constant 0 : index
    %c0_21 = arith.constant 0 : index
    %41 = vector.load %arg8[%c0_20, %c0_21] : memref<8x1xf32, #tpu.memory_space<vmem>>, vector<8x1xf32>
    %42 = arith.select %37, %35, %41 : vector<8x1xi1>, vector<8x1xf32>
    %c0_22 = arith.constant 0 : index
    %c0_23 = arith.constant 0 : index
    %43 = vector.load %arg8[%c0_22, %c0_23] : memref<8x1xf32, #tpu.memory_space<vmem>>, vector<8x1xf32>
    tpu.vector_store %arg8[%c0_22, %c0_23], %42 {strides = array<i32>} : memref<8x1xf32, #tpu.memory_space<vmem>>, vector<8x1xf32>,
    %c0_i32_24 = arith.constant 0 : i32
    %44 = arith.cmpi eq, %arg1, %c0_i32_24 : i32
    %45 = arith.extui %44 : i1 to i32
    %cst_25 = arith.constant 9.99999997E-7 : f32
    %c0_i32_26 = arith.constant 0 : i32
    %46 = arith.cmpi ne, %45, %c0_i32_26 : i32
    scf.if %46 {
      %c0_27 = arith.constant 0 : index
      %c0_28 = arith.constant 0 : index
      %47 = vector.load %arg5[%c0_27, %c0_28] : memref<8x1xf32, #tpu.memory_space<vmem>>, vector<8x1xf32>
      %c0_29 = arith.constant 0 : index
      %c0_30 = arith.constant 0 : index
      %48 = vector.load %arg8[%c0_29, %c0_30] : memref<8x1xf32, #tpu.memory_space<vmem>>, vector<8x1xf32>
      %49 = arith.addf %47, %48 : vector<8x1xf32>
      %cst_31 = arith.constant 3.200000e+01 : f32
      %50 = arith.mulf %cst_31, %cst_25 : f32
      %51 = arith.mulf %50, %cst_25 : f32
      %52 = vector.broadcast %51 : f32 to vector<8x1xf32>
      %53 = arith.addf %49, %52 : vector<8x1xf32>
      %cst_32 = arith.constant 0.000000e+00 : f32
      %54 = vector.broadcast %cst_32 : f32 to vector<8x1xf32>
      %55 = arith.maximumf %53, %54 : vector<8x1xf32>
      %56 = math.sqrt %55 : vector<8x1xf32>
      %cst_33 = arith.constant 9.99999993E-9 : f32
      %57 = vector.broadcast %cst_33 : f32 to vector<8x1xf32>
      %58 = arith.addf %56, %57 : vector<8x1xf32>
      %59 = math.log %58 : vector<8x1xf32>
      %60 = vector.shape_cast %59 : vector<8x1xf32> to vector<1x8x1xf32>
      %cst_34 = arith.constant dense<0.000000e+00> : vector<1xf32>
      %61 = vector.multi_reduction <add>, %60, %cst_34 [1, 2] : vector<1x8x1xf32> to vector<1xf32>
      %62 = vector.shape_cast %61 : vector<1xf32> to vector<1x1x1xf32>
      %63 = vector.extract %62[0, 0, 0] : f32 from vector<1x1x1xf32>
      %64 = vector.broadcast %63 : f32 to vector<1x1x8xf32>
      %c0_35 = arith.constant 0 : index
      %c0_36 = arith.constant 0 : index
      %c0_37 = arith.constant 0 : index
      %65 = vector.load %arg6[%c0_35, %c0_36, %c0_37] : memref<1x1x8xf32, #tpu.memory_space<vmem>>, vector<1x1x8xf32>
      tpu.vector_store %arg6[%c0_35, %c0_36, %c0_37], %64 {strides = array<i32>} : memref<1x1x8xf32, #tpu.memory_space<vmem>>, vector<1x1x8xf32>,
    } else {
    }
    return
  }
  func.func @transform_0(%arg0: i32, %arg1: i32) -> (i32, i32) {
    %c0_i32 = arith.constant 0 : i32
    %c0_i32_0 = arith.constant 0 : i32
    return %arg0, %c0_i32 : i32, i32
  }
  func.func @transform_1(%arg0: i32, %arg1: i32) -> (i32, i32) {
    %c0_i32 = arith.constant 0 : i32
    %c0_i32_0 = arith.constant 0 : i32
    return %arg1, %c0_i32 : i32, i32
  }
  func.func @transform_2(%arg0: i32, %arg1: i32) -> (i32, i32) {
    %c0_i32 = arith.constant 0 : i32
    %c0_i32_0 = arith.constant 0 : i32
    return %c0_i32, %arg1 : i32, i32
  }
  func.func @transform_3(%arg0: i32, %arg1: i32) -> (i32, i32) {
    %c0_i32 = arith.constant 0 : i32
    %c0_i32_0 = arith.constant 0 : i32
    return %arg0, %c0_i32 : i32, i32
  }
  func.func @transform_4(%arg0: i32, %arg1: i32) -> (i32, i32, i32) {
    %c0_i32 = arith.constant 0 : i32
    %c0_i32_0 = arith.constant 0 : i32
    %c0_i32_1 = arith.constant 0 : i32
    return %arg0, %c0_i32, %c0_i32_0 : i32, i32, i32
  }
}

</mosaic_0001>

<llo_original>
// kernel: tpu_custom_call.1
$region0: #{tpu_custom_call.1}
  #allocation0 [shape = 'u32[]', space=smem, size = 0x4, offset = 0x4, fixed_abs, tag = 'smem constant byte address 0x4 - core index']
  #allocation1 [shape = 'u32[72,128]{1,0:T(1,128)}', space=vmem, size = 0x9000, scoped, tag = 'internal scratch']
  #allocation2 [shape = 'f32[8,1]{1,0:T(8,128)}', space=vmem, size = 0x1000, scoped, tag = 'scratch operand']
  #allocation3 [shape = 'f32[8,1]{1,0:T(8,128)}', space=vmem, size = 0x1000, scoped, tag = 'scratch operand']
  %s0 = inlined_call_operand.vmem [shape: f32[8,128], index: 0, kind: input, shape index: {}]
  %s1 = inlined_call_operand.hbm [shape: f32[8,128], index: 1, kind: input, shape index: {}]
  %s2 = inlined_call_operand.vmem [shape: f32[1,8], index: 2, kind: input, shape index: {}]
  %s3 = inlined_call_operand.vmem [shape: f32[8,1], index: 3, kind: input, shape index: {}]
  %s4 = inlined_call_operand.hbm [shape: f32[1,1,8], index: 4, kind: output, shape index: {}]
  %s5 = sld [smem:[#allocation0]]
  $region38: #{tpu_custom_call.1} parent=0
    _
  %s7 = ssub.s32 1, %s5
  %s8 = scalar_select 0, %s7, %s5
  $region1: #{tpu_custom_call.1} parent=0
    #allocation4 [shape = 'u8[4096]{0}', space=vmem, size = 0x1000, scoped, tag = 'input window, operand 1, single buffered']
    #allocation5 [shape = 's32[1]{0}', space=sflag, size = 0x4, scoped, tag = 'scoped memory for tpu_custom_call.1']
    #allocation6 [shape = 's32[1]{0}', space=sflag, size = 0x4, scoped, tag = 'scoped memory for tpu_custom_call.1']
    #allocation7 [shape = 'u8[512]{0}', space=vmem, size = 0x400, scoped, tag = 'output window, operand 0, single buffered']
    %9 = vsyncpa [#allocation5], 0
    %10 = vsyncpa [#allocation6], 0
    // Predicated region
    $region2: #{tpu_custom_call.1} parent=1 // pred_check
      _
    $region3: #{tpu_custom_call.1} parent=1 // pred_check_branch
      %12 = sbr.rel (0) target = $region5
    $region4: #{tpu_custom_call.1} parent=1 // pred_region
      _
    $region5: #{tpu_custom_call.1} parent=1 // pred_fallthru
      _
    // Predicated region
    $region6: #{tpu_custom_call.1} parent=1 // pred_check
      _
    $region7: #{tpu_custom_call.1} parent=1 // pred_check_branch
      %14 = sbr.rel (0) target = $region9
    $region8: #{tpu_custom_call.1} parent=1 // pred_region
      %16 = vsyncadd [#allocation5], 0
      %s18 = sshll.u32 %s1, 4
      %s19 = int_to_ptr.hbm [resolvable:$true] %s18
      %s20 = sshll.u32 [#allocation4], 4
      %s21 = int_to_ptr.vmem [resolvable:$true] %s20
      %23 = dma.hbm_to_vmem [thread:$0]  %s19, 128, %s21, [#allocation5]
    $region9: #{tpu_custom_call.1} parent=1 // pred_fallthru
      _
    // Predicated region
    $region10: #{tpu_custom_call.1} parent=1 // pred_check
      _
    $region11: #{tpu_custom_call.1} parent=1 // pred_check_branch
      %25 = sbr.rel (0) target = $region13
    $region12: #{tpu_custom_call.1} parent=1 // pred_region
      _
    $region13: #{tpu_custom_call.1} parent=1 // pred_fallthru
      _
    // Predicated region
    $region14: #{tpu_custom_call.1} parent=1 // pred_check
      _
    $region15: #{tpu_custom_call.1} parent=1 // pred_check_branch
      %27 = sbr.rel (0) target = $region17
    $region16: #{tpu_custom_call.1} parent=1 // pred_region
      _
    $region17: #{tpu_custom_call.1} parent=1 // pred_fallthru
      _
    // Predicated region
    $region18: #{tpu_custom_call.1} parent=1 // pred_check
      _
    $region19: #{tpu_custom_call.1} parent=1 // pred_check_branch
      %29 = sbr.rel (0) target = $region21
    $region20: #{tpu_custom_call.1} parent=1 // pred_region
      %31 = dma.done [#allocation5], 128
    $region21: #{tpu_custom_call.1} parent=1 // pred_fallthru
      _
    %p32 = scmp.eq.s32.totalorder 0, 0
    // Predicated region
    $region22: #{tpu_custom_call.1} parent=1 // pred_check
      %p33 = pneg %p32
    $region23: #{tpu_custom_call.1} parent=1 // pred_check_branch
      %35 = sbr.rel (%p33) target = $region25
    $region24: #{tpu_custom_call.1} parent=1 // pred_region
      %vm36 = vcmask 7168
      %37 = vst.msk [vmem:[#allocation2] sm:$0xff] %vm36, -3e+38
      %38 = vst.msk [vmem:[#allocation3] sm:$0xff] %vm36, 0.0
    $region25: #{tpu_custom_call.1} parent=1 // pred_fallthru
      _
    %v39 = vld [vmem:[%s0] sm:$0xff]
    %v40 = vld [vmem:[#allocation4] sm:$0xff]
    %41 = vmatpush.xpose.msra.mxu0 0.0
    %42 = vmatpush.xpose.msra.mxu0 0.0
    %43 = vmatpush.xpose.msra.mxu0 0.0
    %44 = vmatpush.xpose.msra.mxu0 0.0
    %45 = vmatpush.xpose.msra.mxu0 0.0
    %46 = vmatpush.xpose.msra.mxu0 0.0
    %47 = vmatpush.xpose.msra.mxu0 0.0
    %48 = vmatpush.xpose.msra.mxu0 0.0
    %49 = vmatpush.xpose.msra.mxu0 0.0
    %50 = vmatpush.xpose.msra.mxu0 0.0
    %51 = vmatpush.xpose.msra.mxu0 0.0
    %52 = vmatpush.xpose.msra.mxu0 0.0
    %53 = vmatpush.xpose.msra.mxu0 0.0
    %54 = vmatpush.xpose.msra.mxu0 0.0
    %55 = vmatpush.xpose.msra.mxu0 0.0
    %56 = vmatpush.xpose.msra.mxu0 %v40
    %57 = vmatmul.f32.gmra.mxu0 %v39
    %v58 = vpop.f32.mrf.mxu0
    %v59 = vadd.f32 0.0, %v58
    %60 = vdwg.mxu0
    %v61 = vlaneseq
    %v62 = vand.u32 %v61, 127
    %v63 = vlaneseq
    %v64 = vshrl.u32 %v63, 7
    %s65 = smul.u32 0, 8
    %s66 = smul.u32 0, 8
    %s67 = ssub.s32 %s65, %s66
    %v68 = vstv %s67
    %v69 = vadd.s32 %v64, %v68
    %vm70 = vcmp.eq.s32.totalorder %v62, %v69
    %v71 = vsel %vm70, -1.0, %v59
    %vm72 = vcmask 64512
    %v73 = vsel %vm72, %v71, -inf
    %74 = vmax.xlane.f32.xlu0 %v73
    %v75 = vpop.xlane.xlu0 %74
    %vm76 = vcmp.eq.f32.partialorder %v71, %v75
    %v77 = vsel %vm76, %v62, 8
    %v78 = vsel %vm72, %v77, 2147483647
    %v79 = vand.u32 %v78, 65535
    %v80 = vshra.s32 %v78, 16
    %v81 = vcvt.s32.f32 %v79
    %v82 = vcvt.s32.f32 %v80
    %83 = vmin.xlane.f32.xlu0 %v82
    %v84 = vpop.xlane.xlu0 %83
    %vm85 = vcmp.eq.f32.partialorder %v82, %v84
    %v86 = vsel %vm85, %v81, inf
    %87 = vmin.xlane.f32.xlu0 %v86
    %v88 = vpop.xlane.xlu0 %87
    %v89 = vcvt.f32.s32 %v88
    %v90 = vcvt.f32.s32 %v84
    %v91 = vshll.u32 %v90, 16
    %v92 = vadd.s32 %v91, %v89
    %vm93 = vcmp.eq.s32.totalorder %v62, %v92
    %v94 = vld [vmem:[%s2] sm:$0x1]
    %v95 = vmul.f32 %v59, 2.0
    %v97 = vperm.slane %v94, 0
    %v99 = vsub.f32 %v97, %v95
    %v100 = vsel %vm93, %v99, 0.0
    %v101 = vsel %vm72, %v100, 0.0
    %102 = vadd.xlane.f32.xlu0 %v101
    %v103 = vpop.xlane.xlu0 %102
    %v104 = vld [vmem:[#allocation2] sm:$0xff]
    %vm105 = vcmp.gt.f32.partialorder %v75, %v104
    %v106 = vsel %vm105, %v75, %v104
    %vm107 = vcmask 7168
    %108 = vst.msk [vmem:[#allocation2] sm:$0xff] %vm107, %v106
    %v109 = vld [vmem:[#allocation3] sm:$0xff]
    %v110 = vsel %vm105, %v103, %v109
    %111 = vst.msk [vmem:[#allocation3] sm:$0xff] %vm107, %v110
    // Predicated region
    $region26: #{tpu_custom_call.1} parent=1 // pred_check
      %p112 = pneg %p32
    $region27: #{tpu_custom_call.1} parent=1 // pred_check_branch
      %114 = sbr.rel (%p112) target = $region29
    $region28: #{tpu_custom_call.1} parent=1 // pred_region
      %v115 = vld [vmem:[%s3] sm:$0xff]
      %v116 = vld [vmem:[#allocation3] sm:$0xff]
      %v117 = vadd.f32 %v115, %v116
      %v118 = vadd.f32 %v117, 3.2e-11
      %v119 = vmax.f32 %v118, 0.0
      %v120 = vrsqrt.pop %v119
      %v121 = vmul.f32 %v120, %v119
      %v122 = vmul.f32 %v121, %v120
      %v123 = vmul.f32 0.5, %v122
      %v124 = vsub.f32 1.5, %v123
      %v125 = vmul.f32 %v120, %v124
      %v126 = vmul.f32 %v119, %v125
      %vm127 = vcmp.eq.f32.partialorder %v119, inf
      %v128 = vsel %vm127, %v119, %v126
      %vm129 = vcmp.eq.f32.partialorder %v119, 0.0
      %v130 = vand.u32 %v119, 2147483648
      %v131 = vsel %vm129, %v130, %v128
      %v132 = vadd.f32 %v131, 1e-08
      %v133 = vlog2.pop %v132
      %v134 = vmul.f32 %v133, 0.6931472
      %v135 = vsel %vm107, %v134, 0.0
      %136 = vadd.xlane.f32.xlu0 %v135
      %v137 = vpop.xlane.xlu0 %136
      %v138 = vrot.slane %v137, 4
      %v139 = vadd.f32 %v137, %v138
      %v140 = vrot.slane %v139, 2
      %v141 = vadd.f32 %v139, %v140
      %v142 = vrot.slane %v141, 1
      %v143 = vadd.f32 %v141, %v142
      %s144 = vtos %v143
      %v145 = vstv %s144
      %vm146 = vcmask 57344
      %147 = vst.msk [vmem:[#allocation7] sm:$0x1] %vm146, %v145
    $region29: #{tpu_custom_call.1} parent=1 // pred_fallthru
      _
    // Predicated region
    $region30: #{tpu_custom_call.1} parent=1 // pred_check
      _
    $region31: #{tpu_custom_call.1} parent=1 // pred_check_branch
      %149 = sbr.rel (0) target = $region33
    $region32: #{tpu_custom_call.1} parent=1 // pred_region
      %151 = vsyncadd [#allocation6], 0
      %s153 = sshll.u32 [#allocation7], 4
      %s154 = int_to_ptr.vmem [resolvable:$true] %s153
      %s155 = sshll.u32 %s4, 4
      %s156 = int_to_ptr.hbm [resolvable:$true] %s155
      %158 = dma.vmem_to_hbm [thread:$0]  %s154, 16, %s156, [#allocation6]
    $region33: #{tpu_custom_call.1} parent=1 // pred_fallthru
      _
    // Predicated region
    $region34: #{tpu_custom_call.1} parent=1 // pred_check
      _
    $region35: #{tpu_custom_call.1} parent=1 // pred_check_branch
      %160 = sbr.rel (0) target = $region37
    $region36: #{tpu_custom_call.1} parent=1 // pred_region
      %162 = dma.done [#allocation6], 16
    $region37: #{tpu_custom_call.1} parent=1 // pred_fallthru
      _
    %163 = vsyncpa [#allocation5], 1
    %164 = vsyncpa [#allocation6], 1

</llo_original>
